<compile_context>
chip_gen: v7x
topology: tpu7x:2x2x1
jax: 0.10.0
libtpu: 0.0.40
codegen_flags: <defaults>
</compile_context>

<pallas_src>
import functools
import math

import jax
import jax.numpy as jnp
from jax.experimental import pallas as pl
from jax.experimental.pallas import tpu as pltpu

_LANES = 128
_SUBLANES = 8
_MAX_BLOCK_ROWS = 1024          # 1024 x 128 f32 = 512 KiB per pipeline block
_LN2 = math.log(2.0)


def _softplus_sum_kernel(negate, x_ref, out_ref, acc_ref):
    """Accumulates sum(softplus(+/- x)) over the 'arbitrary' grid axis.

    acc_ref : VMEM f32 (block_rows, 128) vector accumulator (per core).
    out_ref : (1, 8, 128) per-core partial sums, written on the last step only.
    """
    t = pl.program_id(1)

    @pl.when(t == 0)
    def _():
        acc_ref[...] = jnp.zeros_like(acc_ref)

    x = x_ref[...].astype(jnp.float32)
    if negate:
        x = -x
    # Numerically stable softplus: softplus(x) = max(x, 0) + log1p(exp(-|x|)).
    acc_ref[...] += jnp.maximum(x, 0.0) + jnp.log1p(jnp.exp(-jnp.abs(x)))

    @pl.when(t == pl.num_programs(1) - 1)
    def _():
        acc = acc_ref[...]
        # Fold block_rows -> 8 sublanes (elementwise adds), one small reduce.
        out_ref[0] = jnp.sum(
            acc.reshape(acc.shape[0] // _SUBLANES, _SUBLANES, _LANES), axis=0)


def _plan(n):
    """Static tiling plan: (block_rows, num_cores, tiles_per_core)."""
    rows = pl.cdiv(max(n, 1), _LANES)
    rows = pl.cdiv(rows, _SUBLANES) * _SUBLANES           # sublane-align
    if rows <= _MAX_BLOCK_ROWS:
        return rows, 1, 1                                  # whole array = 1 block
    block_rows = _MAX_BLOCK_ROWS
    total_tiles = pl.cdiv(rows, block_rows)
    num_cores = 2 if total_tiles >= 2 else 1               # v7x 2-TC split
    tiles_per_core = pl.cdiv(total_tiles, num_cores)
    return block_rows, num_cores, tiles_per_core


def _softplus_mean(x, *, negate):
    """mean(softplus(-x)) if negate else mean(softplus(x)), as f32 scalar."""
    n = int(math.prod(x.shape))
    block_rows, num_cores, tiles_per_core = _plan(n)
    padded_rows = num_cores * tiles_per_core * block_rows
    padded_n = padded_rows * _LANES
    pad = padded_n - n

    flat = jnp.ravel(x)                                    # keep original dtype
    if pad:
        # Only materialized when n doesn't already tile the grid coverage.
        # Each padded zero adds exactly softplus(0)=ln2; corrected below.
        flat = jnp.pad(flat, (0, pad))
    x2d = flat.reshape(padded_rows, _LANES)

    out = pl.pallas_call(
        functools.partial(_softplus_sum_kernel, negate),
        out_shape=jax.ShapeDtypeStruct((num_cores, _SUBLANES, _LANES),
                                       jnp.float32),
        grid_spec=pltpu.PrefetchScalarGridSpec(
            num_scalar_prefetch=0,
            grid=(num_cores, tiles_per_core),
            in_specs=[
                pl.BlockSpec((block_rows, _LANES),
                             lambda p, t: (p * tiles_per_core + t, 0)),
            ],
            out_specs=pl.BlockSpec((1, _SUBLANES, _LANES),
                                   lambda p, t: (p, 0, 0)),
            scratch_shapes=[pltpu.VMEM((block_rows, _LANES), jnp.float32)],
        ),
        compiler_params=pltpu.CompilerParams(
            dimension_semantics=("parallel", "arbitrary"),
        ),
    )(x2d)

    total = jnp.sum(out) - jnp.float32(pad * _LN2)
    return total / jnp.float32(n)


@jax.jit
def adv_d_loss(real_pred, fake_pred):
    """JAX/Pallas equivalent of AdvDLoss.forward. Returns an f32 scalar."""
    return (_softplus_mean(real_pred, negate=True)
            + _softplus_mean(fake_pred, negate=False))


def _reference(real_pred, fake_pred):
    real_loss = jax.nn.softplus(-real_pred.astype(jnp.float32))
    fake_loss = jax.nn.softplus(fake_pred.astype(jnp.float32))
    return real_loss.mean() + fake_loss.mean()


if __name__ == "__main__":
    key = jax.random.PRNGKey(0)
    k1, k2, k3 = jax.random.split(key, 3)

    # Discriminator patch predictions, NCHW: [B, C, H, W] = [2, 4, 16, 16].
    real_pred = jax.random.normal(k1, (2, 4, 16, 16), dtype=jnp.float32)
    fake_pred = jax.random.normal(k2, (2, 4, 16, 16), dtype=jnp.float32)

    loss = jax.block_until_ready(adv_d_loss(real_pred, fake_pred))
    ref = _reference(real_pred, fake_pred)
    assert jnp.allclose(loss, ref, rtol=1e-5, atol=1e-5), (loss, ref)

    # Mismatched / non-128-aligned sizes: exercises the zero-pad + ln2
    # correction and the independent per-tensor grids.
    fake_pred2 = jax.random.normal(k3, (2, 1, 30, 30), dtype=jnp.float32)
    loss2 = jax.block_until_ready(adv_d_loss(real_pred, fake_pred2))
    ref2 = _reference(real_pred, fake_pred2)
    assert jnp.allclose(loss2, ref2, rtol=1e-5, atol=1e-5), (loss2, ref2)

    print("KERNEL_OK")
</pallas_src>

<mosaic_0001>
module attributes {stable_mosaic.version = 11 : i64} {
  func.func @_softplus_sum_kernel(%arg0: i32, %arg1: i32, %arg2: memref<16x128xf32, #tpu.memory_space<vmem>>, %arg3: memref<1x8x128xf32, #tpu.memory_space<vmem>>, %arg4: memref<16x128xf32, #tpu.memory_space<vmem>>) attributes {dimension_semantics = [#tpu.dimension_semantics<parallel>, #tpu.dimension_semantics<arbitrary>], iteration_bounds = array<i64: 1, 1>, scalar_prefetch = 0 : i64, scratch_operands = 1 : i64, tpu.core_type = #tpu.core_type<tc>, window_params = [{transform_indices = @transform_0, window_bounds = array<i64: 16, 128>}, {transform_indices = @transform_1, window_bounds = array<i64: 1, 8, 128>}]} {
    %c0_i32 = arith.constant 0 : i32
    %0 = arith.cmpi eq, %arg1, %c0_i32 : i32
    %1 = arith.extui %0 : i1 to i32
    %c0_i32_0 = arith.constant 0 : i32
    %2 = arith.cmpi ne, %1, %c0_i32_0 : i32
    scf.if %2 {
      %cst_10 = arith.constant 0.000000e+00 : f32
      %20 = vector.broadcast %cst_10 : f32 to vector<16x128xf32>
      %c0_11 = arith.constant 0 : index
      %c0_12 = arith.constant 0 : index
      %21 = vector.load %arg4[%c0_11, %c0_12] : memref<16x128xf32, #tpu.memory_space<vmem>>, vector<16x128xf32>
      tpu.vector_store %arg4[%c0_11, %c0_12], %20 {strides = array<i32>} : memref<16x128xf32, #tpu.memory_space<vmem>>, vector<16x128xf32>,
    } else {
    }
    %c0 = arith.constant 0 : index
    %c0_1 = arith.constant 0 : index
    %3 = vector.load %arg2[%c0, %c0_1] : memref<16x128xf32, #tpu.memory_space<vmem>>, vector<16x128xf32>
    %cst = arith.constant 0.000000e+00 : f32
    %4 = vector.broadcast %cst : f32 to vector<16x128xf32>
    %5 = arith.subf %4, %3 : vector<16x128xf32>
    %c0_2 = arith.constant 0 : index
    %c0_3 = arith.constant 0 : index
    %6 = vector.load %arg4[%c0_2, %c0_3] : memref<16x128xf32, #tpu.memory_space<vmem>>, vector<16x128xf32>
    %cst_4 = arith.constant 0.000000e+00 : f32
    %7 = vector.broadcast %cst_4 : f32 to vector<16x128xf32>
    %8 = arith.maximumf %5, %7 : vector<16x128xf32>
    %9 = math.absf %5 : vector<16x128xf32>
    %cst_5 = arith.constant 0.000000e+00 : f32
    %10 = vector.broadcast %cst_5 : f32 to vector<16x128xf32>
    %11 = arith.subf %10, %9 : vector<16x128xf32>
    %12 = math.exp %11 : vector<16x128xf32>
    %13 = math.log1p %12 : vector<16x128xf32>
    %14 = arith.addf %8, %13 : vector<16x128xf32>
    %15 = arith.addf %6, %14 : vector<16x128xf32>
    %c0_6 = arith.constant 0 : index
    %c0_7 = arith.constant 0 : index
    %16 = vector.load %arg4[%c0_6, %c0_7] : memref<16x128xf32, #tpu.memory_space<vmem>>, vector<16x128xf32>
    tpu.vector_store %arg4[%c0_6, %c0_7], %15 {strides = array<i32>} : memref<16x128xf32, #tpu.memory_space<vmem>>, vector<16x128xf32>,
    %c0_i32_8 = arith.constant 0 : i32
    %17 = arith.cmpi eq, %arg1, %c0_i32_8 : i32
    %18 = arith.extui %17 : i1 to i32
    %c0_i32_9 = arith.constant 0 : i32
    %19 = arith.cmpi ne, %18, %c0_i32_9 : i32
    scf.if %19 {
      %c0_10 = arith.constant 0 : index
      %c0_11 = arith.constant 0 : index
      %20 = vector.load %arg4[%c0_10, %c0_11] : memref<16x128xf32, #tpu.memory_space<vmem>>, vector<16x128xf32>
      %21 = vector.shape_cast %20 : vector<16x128xf32> to vector<2x8x128xf32>
      %cst_12 = arith.constant dense<0.000000e+00> : vector<8x128xf32>
      %22 = vector.multi_reduction <add>, %21, %cst_12 [0] : vector<2x8x128xf32> to vector<8x128xf32>
      %c0_13 = arith.constant 0 : index
      %c0_14 = arith.constant 0 : index
      %c0_15 = arith.constant 0 : index
      %23 = vector.load %arg3[%c0_13, %c0_14, %c0_15] : memref<1x8x128xf32, #tpu.memory_space<vmem>>, vector<1x8x128xf32>
      %24 = vector.shape_cast %23 : vector<1x8x128xf32> to vector<8x128xf32>
      %25 = vector.shape_cast %22 : vector<8x128xf32> to vector<1x8x128xf32>
      tpu.vector_store %arg3[%c0_13, %c0_14, %c0_15], %25 {strides = array<i32>} : memref<1x8x128xf32, #tpu.memory_space<vmem>>, vector<1x8x128xf32>,
    } else {
    }
    return
  }
  func.func @transform_0(%arg0: i32, %arg1: i32) -> (i32, i32) {
    %c1_i32 = arith.constant 1 : i32
    %0 = arith.muli %arg0, %c1_i32 : i32
    %1 = arith.addi %0, %arg1 : i32
    %c0_i32 = arith.constant 0 : i32
    %c0_i32_0 = arith.constant 0 : i32
    return %1, %c0_i32 : i32, i32
  }
  func.func @transform_1(%arg0: i32, %arg1: i32) -> (i32, i32, i32) {
    %c0_i32 = arith.constant 0 : i32
    %c0_i32_0 = arith.constant 0 : i32
    %c0_i32_1 = arith.constant 0 : i32
    return %arg0, %c0_i32, %c0_i32_0 : i32, i32, i32
  }
}

module attributes {stable_mosaic.version = 11 : i64} {
  func.func @_softplus_sum_kernel(%arg0: i32, %arg1: i32, %arg2: memref<16x128xf32, #tpu.memory_space<vmem>>, %arg3: memref<1x8x128xf32, #tpu.memory_space<vmem>>, %arg4: memref<16x128xf32, #tpu.memory_space<vmem>>) attributes {dimension_semantics = [#tpu.dimension_semantics<parallel>, #tpu.dimension_semantics<arbitrary>], iteration_bounds = array<i64: 1, 1>, scalar_prefetch = 0 : i64, scratch_operands = 1 : i64, tpu.core_type = #tpu.core_type<tc>, window_params = [{transform_indices = @transform_0, window_bounds = array<i64: 16, 128>}, {transform_indices = @transform_1, window_bounds = array<i64: 1, 8, 128>}]} {
    %c0_i32 = arith.constant 0 : i32
    %0 = arith.cmpi eq, %arg1, %c0_i32 : i32
    %1 = arith.extui %0 : i1 to i32
    %c0_i32_0 = arith.constant 0 : i32
    %2 = arith.cmpi ne, %1, %c0_i32_0 : i32
    scf.if %2 {
      %cst_9 = arith.constant 0.000000e+00 : f32
      %18 = vector.broadcast %cst_9 : f32 to vector<16x128xf32>
      %c0_10 = arith.constant 0 : index
      %c0_11 = arith.constant 0 : index
      %19 = vector.load %arg4[%c0_10, %c0_11] : memref<16x128xf32, #tpu.memory_space<vmem>>, vector<16x128xf32>
      tpu.vector_store %arg4[%c0_10, %c0_11], %18 {strides = array<i32>} : memref<16x128xf32, #tpu.memory_space<vmem>>, vector<16x128xf32>,
    } else {
    }
    %c0 = arith.constant 0 : index
    %c0_1 = arith.constant 0 : index
    %3 = vector.load %arg2[%c0, %c0_1] : memref<16x128xf32, #tpu.memory_space<vmem>>, vector<16x128xf32>
    %c0_2 = arith.constant 0 : index
    %c0_3 = arith.constant 0 : index
    %4 = vector.load %arg4[%c0_2, %c0_3] : memref<16x128xf32, #tpu.memory_space<vmem>>, vector<16x128xf32>
    %cst = arith.constant 0.000000e+00 : f32
    %5 = vector.broadcast %cst : f32 to vector<16x128xf32>
    %6 = arith.maximumf %3, %5 : vector<16x128xf32>
    %7 = math.absf %3 : vector<16x128xf32>
    %cst_4 = arith.constant 0.000000e+00 : f32
    %8 = vector.broadcast %cst_4 : f32 to vector<16x128xf32>
    %9 = arith.subf %8, %7 : vector<16x128xf32>
    %10 = math.exp %9 : vector<16x128xf32>
    %11 = math.log1p %10 : vector<16x128xf32>
    %12 = arith.addf %6, %11 : vector<16x128xf32>
    %13 = arith.addf %4, %12 : vector<16x128xf32>
    %c0_5 = arith.constant 0 : index
    %c0_6 = arith.constant 0 : index
    %14 = vector.load %arg4[%c0_5, %c0_6] : memref<16x128xf32, #tpu.memory_space<vmem>>, vector<16x128xf32>
    tpu.vector_store %arg4[%c0_5, %c0_6], %13 {strides = array<i32>} : memref<16x128xf32, #tpu.memory_space<vmem>>, vector<16x128xf32>,
    %c0_i32_7 = arith.constant 0 : i32
    %15 = arith.cmpi eq, %arg1, %c0_i32_7 : i32
    %16 = arith.extui %15 : i1 to i32
    %c0_i32_8 = arith.constant 0 : i32
    %17 = arith.cmpi ne, %16, %c0_i32_8 : i32
    scf.if %17 {
      %c0_9 = arith.constant 0 : index
      %c0_10 = arith.constant 0 : index
      %18 = vector.load %arg4[%c0_9, %c0_10] : memref<16x128xf32, #tpu.memory_space<vmem>>, vector<16x128xf32>
      %19 = vector.shape_cast %18 : vector<16x128xf32> to vector<2x8x128xf32>
      %cst_11 = arith.constant dense<0.000000e+00> : vector<8x128xf32>
      %20 = vector.multi_reduction <add>, %19, %cst_11 [0] : vector<2x8x128xf32> to vector<8x128xf32>
      %c0_12 = arith.constant 0 : index
      %c0_13 = arith.constant 0 : index
      %c0_14 = arith.constant 0 : index
      %21 = vector.load %arg3[%c0_12, %c0_13, %c0_14] : memref<1x8x128xf32, #tpu.memory_space<vmem>>, vector<1x8x128xf32>
      %22 = vector.shape_cast %21 : vector<1x8x128xf32> to vector<8x128xf32>
      %23 = vector.shape_cast %20 : vector<8x128xf32> to vector<1x8x128xf32>
      tpu.vector_store %arg3[%c0_12, %c0_13, %c0_14], %23 {strides = array<i32>} : memref<1x8x128xf32, #tpu.memory_space<vmem>>, vector<1x8x128xf32>,
    } else {
    }
    return
  }
  func.func @transform_0(%arg0: i32, %arg1: i32) -> (i32, i32) {
    %c1_i32 = arith.constant 1 : i32
    %0 = arith.muli %arg0, %c1_i32 : i32
    %1 = arith.addi %0, %arg1 : i32
    %c0_i32 = arith.constant 0 : i32
    %c0_i32_0 = arith.constant 0 : i32
    return %1, %c0_i32 : i32, i32
  }
  func.func @transform_1(%arg0: i32, %arg1: i32) -> (i32, i32, i32) {
    %c0_i32 = arith.constant 0 : i32
    %c0_i32_0 = arith.constant 0 : i32
    %c0_i32_1 = arith.constant 0 : i32
    return %arg0, %c0_i32, %c0_i32_0 : i32, i32, i32
  }
}

</mosaic_0001>

<llo_original>
// kernel: adv_d_loss.2
$region0: #{adv_d_loss.2}
  #allocation0 [shape = 'u32[]', space=smem, size = 0x4, offset = 0x4, fixed_abs, tag = 'smem constant byte address 0x4 - core index']
  #allocation1 [shape = 'u32[144,128]{1,0:T(1,128)}', space=vmem, size = 0x12000, scoped, tag = 'internal scratch']
  #allocation2 [shape = 'f32[16,128]{1,0:T(8,128)}', space=vmem, size = 0x2000, scoped, tag = 'scratch operand']
  %s0 = inlined_call_operand.vmem [shape: f32[16,128], index: 0, kind: input, shape index: {}]
  %s1 = inlined_call_operand.vmem [shape: f32[1,8,128], index: 1, kind: output, shape index: {}]
  %s2 = sld [smem:[#allocation0]]
  $region22: #{adv_d_loss.2} parent=0
    _
  %s4 = ssub.s32 1, %s2
  %s5 = scalar_select 0, %s4, %s2
  // Predicated region
  $region2: #{adv_d_loss.2} parent=0 // pred_check
    _
  $region3: #{adv_d_loss.2} parent=0 // pred_check_branch
    %7 = sbr.rel (0) target = $region5
  $region4: #{adv_d_loss.2} parent=0 // pred_region
    %s8 = sadd.s32 0, 0
    %s9 = smul.u32 2, %s8
    %p10 = scmp.lt.s32.totalorder %s9, 1
    %s11 = scalar_select %p10, %s9, 1
    %s12 = smul.addr %s11, 8
    %s13 = scalar_lea.vmem %s0, %s12
    %s14 = sadd.s32 0, 0
    %s15 = smul.u32 2, %s14
  $region5: #{adv_d_loss.2} parent=0 // pred_fallthru
    _
  %s16 = sadd.s32 0, 0
  %s17 = smul.u32 2, %s16
  %p18 = scmp.lt.s32.totalorder %s17, 1
  %s19 = scalar_select %p18, %s17, 1
  %s20 = smul.addr %s19, 8
  %s21 = scalar_lea.vmem %s0, %s20
  %s22 = sadd.s32 0, 0
  %s23 = smul.u32 2, %s22
  %p24 = scmp.lt.s32.totalorder %s23, 1
  %s25 = scalar_select %p24, %s23, 1
  %s26 = smul.addr %s25, 8
  %s27 = scalar_lea.vmem %s0, %s26
  %s28 = sadd.s32 0, 0
  %s29 = smul.u32 2, %s28
  %p30 = scmp.eq.s32.totalorder 0, 0
  // Predicated region
  $region6: #{adv_d_loss.2} parent=0 // pred_check
    %p31 = pneg %p30
  $region7: #{adv_d_loss.2} parent=0 // pred_check_branch
    %33 = sbr.rel (%p31) target = $region9
  $region8: #{adv_d_loss.2} parent=0 // pred_region
    %34 = vst [vmem:[#allocation2] sm:$0xff] 0.0
    %35 = vst [vmem:[#allocation2 + $0x8] sm:$0xff] 0.0
  $region9: #{adv_d_loss.2} parent=0 // pred_fallthru
    _
  %v36 = vld [vmem:[%s27] sm:$0xff]
  %v37 = vld [vmem:[%s27 + $0x8] sm:$0xff]
  %v38 = vsub.f32 0.0, %v36
  %v39 = vsub.f32 0.0, %v37
  %v40 = vld [vmem:[#allocation2] sm:$0xff]
  %v41 = vld [vmem:[#allocation2 + $0x8] sm:$0xff]
  %v42 = vmax.f32 %v38, 0.0
  %v43 = vmax.f32 %v39, 0.0
  %v44 = vand.u32 2147483647, %v38
  %v45 = vand.u32 2147483647, %v39
  %v46 = vsub.f32 0.0, %v44
  %v47 = vsub.f32 0.0, %v45
  %v48 = vmul.f32 %v46, 1.442695
  %v49 = vpow.pop %v48
  %v50 = vmul.f32 %v47, 1.442695
  %v51 = vpow.pop %v50
  %v52 = vadd.f32 %v49, 1.0
  %v53 = vlog2.pop %v52
  %v54 = vmul.f32 %v53, 0.6931472
  %v55 = vmul.f32 -0.5, %v49
  %v56 = vadd.f32 %v55, 1.0
  %v57 = vmul.f32 %v56, %v49
  %v58 = vand.u32 2147483647, %v49
  %vm59 = vcmp.lt.f32.partialorder %v58, 0.0004427343
  %v60 = vsel %vm59, %v57, %v54
  %v61 = vadd.f32 %v51, 1.0
  %v62 = vlog2.pop %v61
  %v63 = vmul.f32 %v62, 0.6931472
  %v64 = vmul.f32 -0.5, %v51
  %v65 = vadd.f32 %v64, 1.0
  %v66 = vmul.f32 %v65, %v51
  %v67 = vand.u32 2147483647, %v51
  %vm68 = vcmp.lt.f32.partialorder %v67, 0.0004427343
  %v69 = vsel %vm68, %v66, %v63
  %v70 = vadd.f32 %v42, %v60
  %v71 = vadd.f32 %v43, %v69
  %v72 = vadd.f32 %v40, %v70
  %v73 = vadd.f32 %v41, %v71
  %74 = vst [vmem:[#allocation2] sm:$0xff] %v72
  %75 = vst [vmem:[#allocation2 + $0x8] sm:$0xff] %v73
  // Predicated region
  $region10: #{adv_d_loss.2} parent=0 // pred_check
    %p76 = pneg %p30
  $region11: #{adv_d_loss.2} parent=0 // pred_check_branch
    %78 = sbr.rel (%p76) target = $region13
  $region12: #{adv_d_loss.2} parent=0 // pred_region
    %v79 = vld [vmem:[#allocation2] sm:$0xff]
    %v80 = vld [vmem:[#allocation2 + $0x8] sm:$0xff]
    %v81 = vadd.f32 %v79, %v80
    %82 = vst [vmem:[%s1] sm:$0xff] %v81
  $region13: #{adv_d_loss.2} parent=0 // pred_fallthru
    _
  // Predicated region
  $region14: #{adv_d_loss.2} parent=0 // pred_check
    _
  $region15: #{adv_d_loss.2} parent=0 // pred_check_branch
    %84 = sbr.rel (0) target = $region17
  $region16: #{adv_d_loss.2} parent=0 // pred_region
    _
  $region17: #{adv_d_loss.2} parent=0 // pred_fallthru
    _
  // Predicated region
  $region18: #{adv_d_loss.2} parent=0 // pred_check
    _
  $region19: #{adv_d_loss.2} parent=0 // pred_check_branch
    %86 = sbr.rel (0) target = $region21
  $region20: #{adv_d_loss.2} parent=0 // pred_region
    _
  $region21: #{adv_d_loss.2} parent=0 // pred_fallthru
    _

// kernel: adv_d_loss.3
$region0: #{adv_d_loss.3}
  #allocation0 [shape = 'u32[]', space=smem, size = 0x4, offset = 0x4, fixed_abs, tag = 'smem constant byte address 0x4 - core index']
  #allocation1 [shape = 'u32[144,128]{1,0:T(1,128)}', space=vmem, size = 0x12000, scoped, tag = 'internal scratch']
  #allocation2 [shape = 'f32[16,128]{1,0:T(8,128)}', space=vmem, size = 0x2000, scoped, tag = 'scratch operand']
  %s0 = inlined_call_operand.vmem [shape: f32[16,128], index: 0, kind: input, shape index: {}]
  %s1 = inlined_call_operand.vmem [shape: f32[1,8,128], index: 1, kind: output, shape index: {}]
  %s2 = sld [smem:[#allocation0]]
  $region22: #{adv_d_loss.3} parent=0
    _
  %s4 = ssub.s32 1, %s2
  %s5 = scalar_select 0, %s4, %s2
  // Predicated region
  $region2: #{adv_d_loss.3} parent=0 // pred_check
    _
  $region3: #{adv_d_loss.3} parent=0 // pred_check_branch
    %7 = sbr.rel (0) target = $region5
  $region4: #{adv_d_loss.3} parent=0 // pred_region
    %s8 = sadd.s32 0, 0
    %s9 = smul.u32 2, %s8
    %p10 = scmp.lt.s32.totalorder %s9, 1
    %s11 = scalar_select %p10, %s9, 1
    %s12 = smul.addr %s11, 8
    %s13 = scalar_lea.vmem %s0, %s12
    %s14 = sadd.s32 0, 0
    %s15 = smul.u32 2, %s14
  $region5: #{adv_d_loss.3} parent=0 // pred_fallthru
    _
  %s16 = sadd.s32 0, 0
  %s17 = smul.u32 2, %s16
  %p18 = scmp.lt.s32.totalorder %s17, 1
  %s19 = scalar_select %p18, %s17, 1
  %s20 = smul.addr %s19, 8
  %s21 = scalar_lea.vmem %s0, %s20
  %s22 = sadd.s32 0, 0
  %s23 = smul.u32 2, %s22
  %p24 = scmp.lt.s32.totalorder %s23, 1
  %s25 = scalar_select %p24, %s23, 1
  %s26 = smul.addr %s25, 8
  %s27 = scalar_lea.vmem %s0, %s26
  %s28 = sadd.s32 0, 0
  %s29 = smul.u32 2, %s28
  %p30 = scmp.eq.s32.totalorder 0, 0
  // Predicated region
  $region6: #{adv_d_loss.3} parent=0 // pred_check
    %p31 = pneg %p30
  $region7: #{adv_d_loss.3} parent=0 // pred_check_branch
    %33 = sbr.rel (%p31) target = $region9
  $region8: #{adv_d_loss.3} parent=0 // pred_region
    %34 = vst [vmem:[#allocation2] sm:$0xff] 0.0
    %35 = vst [vmem:[#allocation2 + $0x8] sm:$0xff] 0.0
  $region9: #{adv_d_loss.3} parent=0 // pred_fallthru
    _
  %v36 = vld [vmem:[%s27] sm:$0xff]
  %v37 = vld [vmem:[%s27 + $0x8] sm:$0xff]
  %v38 = vld [vmem:[#allocation2] sm:$0xff]
  %v39 = vld [vmem:[#allocation2 + $0x8] sm:$0xff]
  %v40 = vmax.f32 %v36, 0.0
  %v41 = vmax.f32 %v37, 0.0
  %v42 = vand.u32 2147483647, %v36
  %v43 = vand.u32 2147483647, %v37
  %v44 = vsub.f32 0.0, %v42
  %v45 = vsub.f32 0.0, %v43
  %v46 = vmul.f32 %v44, 1.442695
  %v47 = vpow.pop %v46
  %v48 = vmul.f32 %v45, 1.442695
  %v49 = vpow.pop %v48
  %v50 = vadd.f32 %v47, 1.0
  %v51 = vlog2.pop %v50
  %v52 = vmul.f32 %v51, 0.6931472
  %v53 = vmul.f32 -0.5, %v47
  %v54 = vadd.f32 %v53, 1.0
  %v55 = vmul.f32 %v54, %v47
  %v56 = vand.u32 2147483647, %v47
  %vm57 = vcmp.lt.f32.partialorder %v56, 0.0004427343
  %v58 = vsel %vm57, %v55, %v52
  %v59 = vadd.f32 %v49, 1.0
  %v60 = vlog2.pop %v59
  %v61 = vmul.f32 %v60, 0.6931472
  %v62 = vmul.f32 -0.5, %v49
  %v63 = vadd.f32 %v62, 1.0
  %v64 = vmul.f32 %v63, %v49
  %v65 = vand.u32 2147483647, %v49
  %vm66 = vcmp.lt.f32.partialorder %v65, 0.0004427343
  %v67 = vsel %vm66, %v64, %v61
  %v68 = vadd.f32 %v40, %v58
  %v69 = vadd.f32 %v41, %v67
  %v70 = vadd.f32 %v38, %v68
  %v71 = vadd.f32 %v39, %v69
  %72 = vst [vmem:[#allocation2] sm:$0xff] %v70
  %73 = vst [vmem:[#allocation2 + $0x8] sm:$0xff] %v71
  // Predicated region
  $region10: #{adv_d_loss.3} parent=0 // pred_check
    %p74 = pneg %p30
  $region11: #{adv_d_loss.3} parent=0 // pred_check_branch
    %76 = sbr.rel (%p74) target = $region13
  $region12: #{adv_d_loss.3} parent=0 // pred_region
    %v77 = vld [vmem:[#allocation2] sm:$0xff]
    %v78 = vld [vmem:[#allocation2 + $0x8] sm:$0xff]
    %v79 = vadd.f32 %v77, %v78
    %80 = vst [vmem:[%s1] sm:$0xff] %v79
  $region13: #{adv_d_loss.3} parent=0 // pred_fallthru
    _
  // Predicated region
  $region14: #{adv_d_loss.3} parent=0 // pred_check
    _
  $region15: #{adv_d_loss.3} parent=0 // pred_check_branch
    %82 = sbr.rel (0) target = $region17
  $region16: #{adv_d_loss.3} parent=0 // pred_region
    _
  $region17: #{adv_d_loss.3} parent=0 // pred_fallthru
    _
  // Predicated region
  $region18: #{adv_d_loss.3} parent=0 // pred_check
    _
  $region19: #{adv_d_loss.3} parent=0 // pred_check_branch
    %84 = sbr.rel (0) target = $region21
  $region20: #{adv_d_loss.3} parent=0 // pred_region
    _
  $region21: #{adv_d_loss.3} parent=0 // pred_fallthru
    _

</llo_original>
